<compile_context>
chip_gen: v6e
topology: v6e:2x2x1
jax: 0.10.0
libtpu: 0.0.40
codegen_flags: <defaults>
</compile_context>

<pallas_src>
import functools

import jax
import jax.numpy as jnp
from jax.experimental import pallas as pl
from jax.experimental.pallas import tpu as pltpu


# ----------------------------------------------------------------------------
# Pallas kernels
# ----------------------------------------------------------------------------
def _pool_conv_kernel(xe_ref, xo_ref, p_ref, w_ref, b_ref, o_ref):
    """Fused 2x2 avg-pool + 1x1 conv (BN folded) + ReLU; one output row/step.
    xe/xo are the even/odd input rows of the pooling pair, p is the (w_out,
    w_in) width-pooling matrix (0.25 entries), so pooling runs on the MXU."""
    xr = xe_ref[0] + xo_ref[0]                                    # (w_in, Cin)
    pooled = jnp.dot(p_ref[...], xr, preferred_element_type=jnp.float32)
    acc = jnp.dot(pooled.astype(w_ref.dtype), w_ref[...],
                  preferred_element_type=jnp.float32)
    acc = jnp.maximum(acc + b_ref[...], 0.0)
    o_ref[0] = acc.astype(o_ref.dtype)


def _conv_kernel(x_ref, w_ref, b_ref, o_ref, *, relu):
    """1x1 conv (matmul, bf16 MXU) + bias (folded BN) + optional ReLU."""
    acc = jnp.dot(x_ref[...], w_ref[...], preferred_element_type=jnp.float32)
    acc = acc + b_ref[...]
    if relu:
        acc = jnp.maximum(acc, 0.0)
    o_ref[...] = acc.astype(o_ref.dtype)


def _neck_fuse_kernel(x_ref, s_ref, w_ref, b_ref, o_ref):
    """Fused channel-wise correlation (bf16) + 1x1 conv + BN + ReLU."""
    x = x_ref[0] * s_ref[0]                                       # (hw, C) bf16
    acc = jnp.dot(x, w_ref[...], preferred_element_type=jnp.float32)
    o_ref[0] = jnp.maximum(acc + b_ref[...], 0.0).astype(o_ref.dtype)


def _corner_kernel(x_ref, c_ref, w_ref, b_ref, o_ref):
    """Fused corner head: 1x1 conv (Cout padded to 128) + spatial softmax +
    soft-argmax via a (2, hw) coordinate matmul. Only lanes 0,1 are valid."""
    s = jnp.dot(x_ref[0], w_ref[...], preferred_element_type=jnp.float32)
    s = s + b_ref[...]                                            # (hw, 128)
    m = jnp.max(s, axis=0, keepdims=True)
    e = jnp.exp(s - m)
    z = jnp.sum(e, axis=0, keepdims=True)
    p = e / z                                                     # exact
    o_ref[0] = jnp.dot(c_ref[...], p, preferred_element_type=jnp.float32)


def _mask_stage_kernel(y_ref, l_ref, r_ref, wa_ref, ba_ref, w_ref, b_ref,
                       o_ref):
    """Fused mask-head stage, one HIGH-res row per grid step:
         y_hi = nearest-x2 upsample of low-res y row      (repeat matrix, MXU)
         f    = ReLU(l @ Wa + ba)                          (feat_adjust)
         z    = ReLU(y_hi + f)                             (skip-add + ReLU)
         out  = (z @ W + b)[:, :nout]                      (next mask conv)
    The low-res y row is selected by the index_map (i // 2); the upsampled
    tensor never exists in HBM."""
    y_hi = jnp.dot(r_ref[...], y_ref[0], preferred_element_type=jnp.float32)
    f = jnp.dot(l_ref[0], wa_ref[...], preferred_element_type=jnp.float32)
    f = jnp.maximum(f + ba_ref[...], 0.0)
    z = jnp.maximum(y_hi + f, 0.0)
    acc = jnp.dot(z.astype(w_ref.dtype), w_ref[...],
                  preferred_element_type=jnp.float32)
    acc = acc + b_ref[...]
    nout = o_ref.shape[-1]
    o_ref[0] = acc[:, :nout].astype(o_ref.dtype)


# ----------------------------------------------------------------------------
# Pallas wrappers
# ----------------------------------------------------------------------------
def _pick_tm(m, cap=512, min_steps=4):
    """Largest multiple-of-8 divisor of m (<= cap), preferring >= min_steps
    grid steps; falls back to a single full block (block dim == array dim)."""
    divs = [t for t in range(8, min(cap, m) + 1, 8) if m % t == 0]
    if not divs:
        return m
    pref = [t for t in divs if m // t >= min_steps]
    return max(pref) if pref else max(divs)


def conv_mc(x_mc, w, b, *, relu, out_dtype=jnp.bfloat16):
    """(M, Cin) @ (Cin, Cout) + bias (+ReLU); bf16 inputs, f32 accumulation."""
    m, cin = x_mc.shape
    cout = w.shape[1]
    tm = _pick_tm(m)
    return pl.pallas_call(
        functools.partial(_conv_kernel, relu=relu),
        out_shape=jax.ShapeDtypeStruct((m, cout), out_dtype),
        grid=(m // tm,),
        in_specs=[
            pl.BlockSpec((tm, cin), lambda i: (i, 0)),
            pl.BlockSpec((cin, cout), lambda i: (0, 0)),
            pl.BlockSpec((1, cout), lambda i: (0, 0)),
        ],
        out_specs=pl.BlockSpec((tm, cout), lambda i: (i, 0)),
        compiler_params=pltpu.CompilerParams(
            dimension_semantics=("parallel",)),
    )(x_mc, w, b)


def pool_conv_nhwc(x_nhwc, params):
    """Fused 2x2 average pool + 1x1 conv + BN + ReLU on NHWC bf16 data."""
    n, h, w, c = x_nhwc.shape
    ho, wo = h // 2, w // 2
    cout = params["w"].shape[1]
    x_rows = x_nhwc.reshape(n * h, w, c)
    pmat = (0.25 * jnp.repeat(jnp.eye(wo, dtype=jnp.float32), 2, axis=1)
            ).astype(jnp.bfloat16)                               # (wo, w)
    out = pl.pallas_call(
        _pool_conv_kernel,
        out_shape=jax.ShapeDtypeStruct((n * ho, wo, cout), jnp.bfloat16),
        grid=(n * ho,),
        in_specs=[
            pl.BlockSpec((1, w, c), lambda i: (2 * i, 0, 0)),      # even rows
            pl.BlockSpec((1, w, c), lambda i: (2 * i + 1, 0, 0)),  # odd rows
            pl.BlockSpec((wo, w), lambda i: (0, 0)),
            pl.BlockSpec((c, cout), lambda i: (0, 0)),
            pl.BlockSpec((1, cout), lambda i: (0, 0)),
        ],
        out_specs=pl.BlockSpec((1, wo, cout), lambda i: (i, 0, 0)),
        compiler_params=pltpu.CompilerParams(
            dimension_semantics=("parallel",)),
    )(x_rows, x_rows, pmat, params["w"], params["b"])
    return out.reshape(n, ho, wo, cout)


def mask_stage(y_low_rows, skip_nhwc, adj, conv, *, out_channels,
               out_dtype=jnp.bfloat16):
    """Fused upsample + feat_adjust + skip-add + ReLU + next 1x1 conv."""
    b, h_hi, w_hi, cl = skip_nhwc.shape
    cmid = y_low_rows.shape[-1]
    w_lo = w_hi // 2
    cout_w = conv["w"].shape[1]
    l_rows = skip_nhwc.reshape(b * h_hi, w_hi, cl)
    rmat = jnp.repeat(jnp.eye(w_lo, dtype=jnp.float32), 2, axis=0
                      ).astype(jnp.bfloat16)                     # (w_hi, w_lo)
    return pl.pallas_call(
        _mask_stage_kernel,
        out_shape=jax.ShapeDtypeStruct((b * h_hi, w_hi, out_channels),
                                       out_dtype),
        grid=(b * h_hi,),
        in_specs=[
            pl.BlockSpec((1, w_lo, cmid), lambda i: (i // 2, 0, 0)),  # low-res y
            pl.BlockSpec((1, w_hi, cl), lambda i: (i, 0, 0)),         # skip row
            pl.BlockSpec((w_hi, w_lo), lambda i: (0, 0)),             # repeat mat
            pl.BlockSpec((cl, cmid), lambda i: (0, 0)),
            pl.BlockSpec((1, cmid), lambda i: (0, 0)),
            pl.BlockSpec((cmid, cout_w), lambda i: (0, 0)),
            pl.BlockSpec((1, cout_w), lambda i: (0, 0)),
        ],
        out_specs=pl.BlockSpec((1, w_hi, out_channels), lambda i: (i, 0, 0)),
        compiler_params=pltpu.CompilerParams(
            dimension_semantics=("parallel",)),
    )(y_low_rows, l_rows, rmat, adj["w"], adj["b"], conv["w"], conv["b"])


# ----------------------------------------------------------------------------
# XLA glue (layout boundary only)
# ----------------------------------------------------------------------------
def nchw_to_nhwc_bf16(x, pad_c=8):
    x = x.transpose(0, 2, 3, 1)
    c = x.shape[-1]
    if pad_c and pad_c > c:
        x = jnp.pad(x, ((0, 0), (0, 0), (0, 0), (0, pad_c - c)))
    return x.astype(jnp.bfloat16)


# ----------------------------------------------------------------------------
# Deterministic parameter construction (Conv1x1 + BN folded, bf16 weights)
# ----------------------------------------------------------------------------
def make_pw_bn(key, cin, cout, eps=1e-5, pad_cin=None, pad_cout=None):
    k1, k2, k3, k4 = jax.random.split(key, 4)
    w = jax.random.normal(k1, (cin, cout), jnp.float32) / jnp.sqrt(float(cin))
    conv_b = jnp.zeros((cout,), jnp.float32)
    gamma = 1.0 + 0.1 * jax.random.normal(k2, (cout,), jnp.float32)
    beta = 0.1 * jax.random.normal(k3, (cout,), jnp.float32)
    mean = 0.1 * jax.random.normal(k4, (cout,), jnp.float32)
    var = jnp.ones((cout,), jnp.float32)
    scale = gamma / jnp.sqrt(var + eps)
    wf = w * scale[None, :]
    bf = (conv_b - mean) * scale + beta
    if pad_cout is not None and pad_cout > cout:   # lane-dense tiny heads
        wf = jnp.pad(wf, ((0, 0), (0, pad_cout - cout)))
        bf = jnp.pad(bf, ((0, pad_cout - cout),))
    if pad_cin is not None and pad_cin > cin:      # padded input channels
        wf = jnp.pad(wf, ((0, pad_cin - cin), (0, 0)))
    return {"w": wf.astype(jnp.bfloat16),
            "b": bf.reshape(1, -1).astype(jnp.float32)}


# ----------------------------------------------------------------------------
# SEcmnet
# ----------------------------------------------------------------------------
class SEcmnetPallas:
    def __init__(self, key):
        ks = jax.random.split(key, 13)
        # TODO(synk): real backbone is a full ResNet-34; stand-in keeps its
        # channel counts (conv1=64, layer1=64, layer2=128, layer3=256).
        self.backbone = {
            "conv1": make_pw_bn(ks[0], 3, 64, pad_cin=8),
            "layer1": make_pw_bn(ks[1], 64, 64),
            "layer2": make_pw_bn(ks[2], 64, 128),
            "layer3": make_pw_bn(ks[3], 128, 256),
        }
        self.neck_fuse = make_pw_bn(ks[4], 256, 256)
        self.corner_proj = make_pw_bn(ks[5], 256, 2, pad_cout=128)
        # TODO(synk): real corner/mask heads are constructor args; pointwise
        # stand-ins with the documented channel counts are used.
        self.mask_p2 = make_pw_bn(ks[6], 256, 512)
        self.mask_p1 = make_pw_bn(ks[7], 512, 256)
        self.mask_p0 = make_pw_bn(ks[8], 256, 64)
        self.mask_out = make_pw_bn(ks[9], 64, 1, pad_cout=128)
        # feat_adjust exactly as in SEcmnet.__init__ (Conv1x1+BN+ReLU), applied
        # fused inside the mask-head stage kernels:
        self.feat_adjust = [
            make_pw_bn(ks[10], 64, 64),
            make_pw_bn(ks[11], 64, 256),
            make_pw_bn(ks[12], 128, 512),
        ]
        self.ref_kernel = None

    # --- backbone (NHWC, bf16; fused pool+conv stages) ------------------------
    def extract_backbone_features(self, im_nhwc):
        feats = {}
        x = pool_conv_nhwc(im_nhwc, self.backbone["conv1"]);  feats["conv1"] = x
        x = pool_conv_nhwc(x, self.backbone["layer1"]);        feats["layer1"] = x
        x = pool_conv_nhwc(x, self.backbone["layer2"]);        feats["layer2"] = x
        x = pool_conv_nhwc(x, self.backbone["layer3"]);        feats["layer3"] = x
        return feats

    # --- neck -----------------------------------------------------------------
    def neck_get_ref_kernel(self, train_feat_list, train_bb):
        f3 = train_feat_list[-1]                      # (nt*ns, h, w, 256) NHWC
        num_train, num_seq = train_bb.shape[0], train_bb.shape[1]
        # TODO(synk): real neck uses PrRoIPool on train_bb; spatial mean per
        # sequence stands in for the reference kernel.
        ref = f3.astype(jnp.float32).mean(axis=(1, 2))
        ref = ref.reshape(num_train, num_seq, -1).mean(axis=0)
        self.ref_kernel = ref.reshape(num_seq, 1, -1).astype(jnp.bfloat16)

    def neck_fuse_feat(self, test_f3):
        b, h, w, c = test_f3.shape
        assert b == self.ref_kernel.shape[0], \
            "test batch must equal num_sequences (ref_kernel indexing)"
        x = test_f3.reshape(b, h * w, c)
        fused = pl.pallas_call(
            _neck_fuse_kernel,
            out_shape=jax.ShapeDtypeStruct((b, h * w, c), jnp.bfloat16),
            grid=(b,),
            in_specs=[
                pl.BlockSpec((1, h * w, c), lambda i: (i, 0, 0)),
                pl.BlockSpec((1, 1, c), lambda i: (i, 0, 0)),
                pl.BlockSpec((c, c), lambda i: (0, 0)),
                pl.BlockSpec((1, c), lambda i: (0, 0)),
            ],
            out_specs=pl.BlockSpec((1, h * w, c), lambda i: (i, 0, 0)),
            compiler_params=pltpu.CompilerParams(
                dimension_semantics=("parallel",)),
        )(x, self.ref_kernel, self.neck_fuse["w"], self.neck_fuse["b"])
        return fused, (h, w)                           # (B, hw, 256), spatial

    # --- heads ----------------------------------------------------------------
    def corner_head(self, fusion, sp16):
        b, hw, c = fusion.shape
        h16, w16 = sp16
        idx = jnp.arange(hw, dtype=jnp.float32)
        coords = jnp.stack([jnp.mod(idx, float(w16)),
                            jnp.floor(idx / float(w16))], axis=0)  # (2, hw)
        stats = pl.pallas_call(
            _corner_kernel,
            out_shape=jax.ShapeDtypeStruct((b, 2, 128), jnp.float32),
            grid=(b,),
            in_specs=[
                pl.BlockSpec((1, hw, c), lambda i: (i, 0, 0)),
                pl.BlockSpec((2, hw), lambda i: (0, 0)),
                pl.BlockSpec((c, 128), lambda i: (0, 0)),
                pl.BlockSpec((1, 128), lambda i: (0, 0)),
            ],
            out_specs=pl.BlockSpec((1, 2, 128), lambda i: (i, 0, 0)),
            compiler_params=pltpu.CompilerParams(
                dimension_semantics=("parallel",)),
        )(fusion, coords, self.corner_proj["w"], self.corner_proj["b"])
        ex, ey = stats[:, 0, :], stats[:, 1, :]
        return jnp.stack([ex[:, 0], ey[:, 0], ex[:, 1], ey[:, 1]], axis=-1)

    def mask_head(self, fusion, sp16, lfeats):
        # lfeats are the RAW backbone features; feat_adjust is applied fused
        # inside each stage kernel (identical math to adjust-then-add).
        f0, f1, f2 = lfeats    # conv1@1/2 (64), layer1@1/4 (64), layer2@1/8 (128)
        b, hw, c = fusion.shape
        h16, w16 = sp16
        # p2 conv stays at 1/16 resolution (pointwise); upsample is fused below.
        y = conv_mc(fusion.reshape(b * hw, c),
                    self.mask_p2["w"], self.mask_p2["b"], relu=False)
        y = y.reshape(b * h16, w16, -1)                                # 1/16, 512
        # 1/8: fused upsample + feat_adjust[2] + skip + ReLU + mask_p1
        y = mask_stage(y, f2, self.feat_adjust[2], self.mask_p1,
                       out_channels=256)
        # 1/4: fused upsample + feat_adjust[1] + skip + ReLU + mask_p0
        y = mask_stage(y, f1, self.feat_adjust[1], self.mask_p0,
                       out_channels=64)
        # 1/2: fused upsample + feat_adjust[0] + skip + ReLU + mask_out
        #      (single real output channel, no padded lanes written to HBM)
        y = mask_stage(y, f0, self.feat_adjust[0], self.mask_out,
                       out_channels=1, out_dtype=jnp.float32)
        n, h2, w2 = f0.shape[0], f0.shape[1], f0.shape[2]
        return y.reshape(n, h2, w2, 1).transpose(0, 3, 1, 2)   # NCHW boundary

    # --- SEcmnet forward -------------------------------------------------------
    def forward_ref(self, train_imgs, train_bb):
        num_seq = train_imgs.shape[-4]
        num_train = train_imgs.shape[0] if train_imgs.ndim == 5 else 1
        im = nchw_to_nhwc_bf16(train_imgs.reshape(-1, *train_imgs.shape[-3:]))
        feats = self.extract_backbone_features(im)
        self.neck_get_ref_kernel(
            [feats["layer3"]], train_bb.reshape(num_train, num_seq, 4))

    def forward_test(self, test_imgs, mode="train", branches=("corner",)):
        output = {}
        im = nchw_to_nhwc_bf16(test_imgs.reshape(-1, *test_imgs.shape[-3:]))
        feats = self.extract_backbone_features(im)
        lfeats = [feats["conv1"], feats["layer1"], feats["layer2"]]
        fusion, sp16 = self.neck_fuse_feat(feats["layer3"])
        if mode == "train":
            output["corner"] = self.corner_head(fusion, sp16)
            output["mask"] = self.mask_head(fusion, sp16, lfeats)
        elif mode == "test":
            b = fusion.shape[0]
            output["feat"] = fusion.reshape(
                b, sp16[0], sp16[1], -1).transpose(0, 3, 1, 2).astype(jnp.float32)
            if "corner" in branches:
                output["corner"] = self.corner_head(fusion, sp16)
            if "mask" in branches:
                output["mask"] = self.mask_head(fusion, sp16, lfeats)
        else:
            raise ValueError("mode should be train or test")
        return output

    def forward(self, train_imgs, test_imgs, train_bb, mode="train"):
        self.forward_ref(train_imgs, train_bb)
        return self.forward_test(test_imgs, mode)


# ----------------------------------------------------------------------------
if __name__ == "__main__":
    key = jax.random.PRNGKey(0)
    k_param, k_tr, k_te, k_bb = jax.random.split(key, 4)

    B, H, W = 2, 32, 32
    train_imgs = jax.random.normal(k_tr, (1, B, 3, H, W), jnp.float32)
    test_imgs = jax.random.normal(k_te, (1, B, 3, H, W), jnp.float32)
    train_bb = jax.random.uniform(k_bb, (1, B, 4), jnp.float32) * H

    net = SEcmnetPallas(k_param)
    out = net.forward(train_imgs, test_imgs, train_bb, mode="train")

    corner = jax.block_until_ready(out["corner"])   # (B, 4)
    mask = jax.block_until_ready(out["mask"])       # (B, 1, 16, 16)

    assert corner.shape == (B, 4)
    assert mask.shape == (B, 1, H // 2, W // 2)
    assert bool(jnp.all(jnp.isfinite(corner))) and bool(jnp.all(jnp.isfinite(mask)))
    print("KERNEL_OK")
</pallas_src>

<mosaic_0001>
module attributes {stable_mosaic.version = 11 : i64} {
  func.func @_pool_conv_kernel(%arg0: i32, %arg1: memref<1x32x8xbf16, #tpu.memory_space<vmem>>, %arg2: memref<1x32x8xbf16, #tpu.memory_space<vmem>>, %arg3: memref<16x32xbf16, #tpu.memory_space<vmem>>, %arg4: memref<8x64xbf16, #tpu.memory_space<vmem>>, %arg5: memref<1x64xf32, #tpu.memory_space<vmem>>, %arg6: memref<1x16x64xbf16, #tpu.memory_space<vmem>>) attributes {dimension_semantics = [#tpu.dimension_semantics<parallel>], iteration_bounds = array<i64: 32>, scalar_prefetch = 0 : i64, scratch_operands = 0 : i64, tpu.core_type = #tpu.core_type<tc>, window_params = [{transform_indices = @transform_0, window_bounds = array<i64: 1, 32, 8>}, {transform_indices = @transform_1, window_bounds = array<i64: 1, 32, 8>}, {pipeline_mode = #tpu.pipeline_mode<synchronous>, transform_indices = @transform_2, window_bounds = array<i64: 16, 32>}, {pipeline_mode = #tpu.pipeline_mode<synchronous>, transform_indices = @transform_3, window_bounds = array<i64: 8, 64>}, {pipeline_mode = #tpu.pipeline_mode<synchronous>, transform_indices = @transform_4, window_bounds = array<i64: 1, 64>}, {transform_indices = @transform_5, window_bounds = array<i64: 1, 16, 64>}]} {
    %c0 = arith.constant 0 : index
    %c0_0 = arith.constant 0 : index
    %c0_1 = arith.constant 0 : index
    %0 = vector.load %arg1[%c0, %c0_0, %c0_1] : memref<1x32x8xbf16, #tpu.memory_space<vmem>>, vector<1x32x8xbf16>
    %1 = vector.shape_cast %0 : vector<1x32x8xbf16> to vector<32x8xbf16>
    %c0_2 = arith.constant 0 : index
    %c0_3 = arith.constant 0 : index
    %c0_4 = arith.constant 0 : index
    %2 = vector.load %arg2[%c0_2, %c0_3, %c0_4] : memref<1x32x8xbf16, #tpu.memory_space<vmem>>, vector<1x32x8xbf16>
    %3 = vector.shape_cast %2 : vector<1x32x8xbf16> to vector<32x8xbf16>
    %4 = arith.addf %1, %3 : vector<32x8xbf16>
    %c0_5 = arith.constant 0 : index
    %c0_6 = arith.constant 0 : index
    %5 = vector.load %arg3[%c0_5, %c0_6] : memref<16x32xbf16, #tpu.memory_space<vmem>>, vector<16x32xbf16>
    %cst = arith.constant dense<0.000000e+00> : vector<16x8xf32>
    %6 = tpu.matmul %5, %4, %cst {dimension_numbers = #tpu.dot_dimension_numbers<[1], [0], [0], [1], [0, 0, 1, 1], [], []>} : vector<16x32xbf16>, vector<32x8xbf16>, vector<16x8xf32> -> vector<16x8xf32>
    %7 = arith.truncf %6 : vector<16x8xf32> to vector<16x8xbf16>
    %c0_7 = arith.constant 0 : index
    %c0_8 = arith.constant 0 : index
    %8 = vector.load %arg4[%c0_7, %c0_8] : memref<8x64xbf16, #tpu.memory_space<vmem>>, vector<8x64xbf16>
    %cst_9 = arith.constant dense<0.000000e+00> : vector<16x64xf32>
    %9 = tpu.matmul %7, %8, %cst_9 {dimension_numbers = #tpu.dot_dimension_numbers<[1], [0], [0], [1], [0, 0, 1, 1], [], []>} : vector<16x8xbf16>, vector<8x64xbf16>, vector<16x64xf32> -> vector<16x64xf32>
    %c0_10 = arith.constant 0 : index
    %c0_11 = arith.constant 0 : index
    %10 = vector.load %arg5[%c0_10, %c0_11] : memref<1x64xf32, #tpu.memory_space<vmem>>, vector<1x64xf32>
    %11 = vector.broadcast %10 : vector<1x64xf32> to vector<16x64xf32>
    %12 = arith.addf %9, %11 : vector<16x64xf32>
    %cst_12 = arith.constant 0.000000e+00 : f32
    %13 = vector.broadcast %cst_12 : f32 to vector<16x64xf32>
    %14 = arith.maximumf %12, %13 : vector<16x64xf32>
    %15 = arith.truncf %14 : vector<16x64xf32> to vector<16x64xbf16>
    %c0_13 = arith.constant 0 : index
    %c0_14 = arith.constant 0 : index
    %c0_15 = arith.constant 0 : index
    %16 = vector.load %arg6[%c0_13, %c0_14, %c0_15] : memref<1x16x64xbf16, #tpu.memory_space<vmem>>, vector<1x16x64xbf16>
    %17 = vector.shape_cast %16 : vector<1x16x64xbf16> to vector<16x64xbf16>
    %18 = vector.shape_cast %15 : vector<16x64xbf16> to vector<1x16x64xbf16>
    tpu.vector_store %arg6[%c0_13, %c0_14, %c0_15], %18 {strides = array<i32>} : memref<1x16x64xbf16, #tpu.memory_space<vmem>>, vector<1x16x64xbf16>,
    return
  }
  func.func @transform_0(%arg0: i32) -> (i32, i32, i32) {
    %c2_i32 = arith.constant 2 : i32
    %0 = arith.muli %c2_i32, %arg0 : i32
    %c0_i32 = arith.constant 0 : i32
    %c0_i32_0 = arith.constant 0 : i32
    %c0_i32_1 = arith.constant 0 : i32
    return %0, %c0_i32, %c0_i32_0 : i32, i32, i32
  }
  func.func @transform_1(%arg0: i32) -> (i32, i32, i32) {
    %c2_i32 = arith.constant 2 : i32
    %0 = arith.muli %c2_i32, %arg0 : i32
    %c1_i32 = arith.constant 1 : i32
    %1 = arith.addi %0, %c1_i32 : i32
    %c0_i32 = arith.constant 0 : i32
    %c0_i32_0 = arith.constant 0 : i32
    %c0_i32_1 = arith.constant 0 : i32
    return %1, %c0_i32, %c0_i32_0 : i32, i32, i32
  }
  func.func @transform_2(%arg0: i32) -> (i32, i32) {
    %c0_i32 = arith.constant 0 : i32
    %c0_i32_0 = arith.constant 0 : i32
    %c0_i32_1 = arith.constant 0 : i32
    return %c0_i32, %c0_i32_0 : i32, i32
  }
  func.func @transform_3(%arg0: i32) -> (i32, i32) {
    %c0_i32 = arith.constant 0 : i32
    %c0_i32_0 = arith.constant 0 : i32
    %c0_i32_1 = arith.constant 0 : i32
    return %c0_i32, %c0_i32_0 : i32, i32
  }
  func.func @transform_4(%arg0: i32) -> (i32, i32) {
    %c0_i32 = arith.constant 0 : i32
    %c0_i32_0 = arith.constant 0 : i32
    %c0_i32_1 = arith.constant 0 : i32
    return %c0_i32, %c0_i32_0 : i32, i32
  }
  func.func @transform_5(%arg0: i32) -> (i32, i32, i32) {
    %c0_i32 = arith.constant 0 : i32
    %c0_i32_0 = arith.constant 0 : i32
    %c0_i32_1 = arith.constant 0 : i32
    return %arg0, %c0_i32, %c0_i32_0 : i32, i32, i32
  }
}

</mosaic_0001>

<llo_original>
// kernel: tpu_custom_call.1
$region0: #{tpu_custom_call.1}
  #allocation0 [shape = 'u32[]', space=smem, size = 0x4, offset = 0x4, fixed_abs, tag = 'smem constant byte address 0x4 - core index']
  #allocation1 [shape = 'u32[144,128]{1,0:T(1,128)}', space=vmem, size = 0x12000, scoped, tag = 'internal scratch']
  %s0 = inlined_call_operand.vmem [shape: bf16[64,32,8], index: 0, kind: input, shape index: {}]
  %s1 = inlined_call_operand.vmem [shape: bf16[64,32,8], index: 1, kind: input, shape index: {}]
  %s2 = inlined_call_operand.vmem [shape: bf16[16,32], index: 2, kind: input, shape index: {}]
  %s3 = inlined_call_operand.vmem [shape: bf16[8,64], index: 3, kind: input, shape index: {}]
  %s4 = inlined_call_operand.vmem [shape: f32[1,64], index: 4, kind: input, shape index: {}]
  %s5 = inlined_call_operand.hbm [shape: bf16[32,16,64], index: 5, kind: output, shape index: {}]
  %s6 = sld [smem:[#allocation0]]
  $region53: #{tpu_custom_call.1} parent=0
    _
  %s8 = ssub.s32 1, %s6
  %s9 = scalar_select 0, %s8, %s6
  $region1: #{tpu_custom_call.1} parent=0
    #allocation2 [shape = 'u8[8192]{0}', space=vmem, size = 0x2000, scoped, tag = 'output window, operand 0']
    #allocation3 [shape = 's32[2]{0}', space=sflag, size = 0x8, scoped, tag = 'scoped memory for tpu_custom_call.1']
    %10 = vsyncpa [#allocation3], 0
    %s11 = scalar_lea.sflag [#allocation3], 1
    %12 = vsyncpa %s11, 0
    loop: start=0, step=1, limit=34
    $region2: #{tpu_custom_call.1} parent=1 // loop_pre_header
      _
    $region3: #{tpu_custom_call.1} parent=1 // loop_header
      %s14 = sphi 0, %s18
      %p15 = scmp.ge.s32.totalorder %s14, 34
      %s26 = sphi 0, %s28
      %s29 = sphi 0, %s26
      %s30 = sphi 0, %s29
      %s46 = sphi 0, %s30
      %s56 = sphi 0, %s58
      %s59 = sphi 0, %s56
      %s60 = sphi 0, %s59
      %s76 = sphi 0, %s60
      %s80 = sphi 0, %s80
      %s82 = sphi 0, %s80
      %s83 = sphi 0, %s82
      %s97 = sphi 0, %s83
      %s101 = sphi 0, %s101
      %s103 = sphi 0, %s101
      %s104 = sphi 0, %s103
      %s118 = sphi 0, %s104
      %s122 = sphi 0, %s122
      %s124 = sphi 0, %s122
      %s125 = sphi 0, %s124
      %s139 = sphi 0, %s125
      %s145 = sphi 0, %s147
      %s148 = sphi 0, %s145
      %s149 = sphi 0, %s148
      %s165 = sphi 0, %s149
    $region4: #{tpu_custom_call.1} parent=1 // loop_header_branch
      %17 = sbr.rel (%p15) target = $region8
    $region5: #{tpu_custom_call.1} parent=1 // loop_body
      %s19 = ssub.s32 %s14, 1
      %s20 = ssub.s32 %s14, 2
      %s21 = sadd.s32 %s14, 1
      %s22 = smul.u32 %s14, 2
      %s23 = smul.u32 %s21, 2
      %s24 = ssub.s32 %s22, %s23
      %p25 = scmp.eq.s32.totalorder %s24, 0
      %s27 = sadd.s32 %s26, 1
      %s28 = scalar_select %p25, %s26, %s27
      %p31 = pneg %p25
      %p32 = scmp.eq.s32.totalorder %s14, 31
      %p33 = por %p31, %p32
      %p34 = scmp.ne.s32.totalorder %s26, %s29
      %p35 = scmp.eq.s32.totalorder %s14, 0
      %p36 = por %p34, %p35
      %p37 = scmp.ne.s32.totalorder %s26, %s29
      %p38 = scmp.eq.s32.totalorder %s19, 31
      %p39 = por %p37, %p38
      %p40 = scmp.ne.s32.totalorder %s29, %s30
      %p41 = scmp.eq.s32.totalorder %s19, 0
      %p42 = por %p40, %p41
      %p43 = scmp.ne.s32.totalorder %s29, %s30
      %p44 = scmp.eq.s32.totalorder %s20, 31
      %p45 = por %p43, %p44
      %p47 = scmp.ne.s32.totalorder %s30, %s46
      %p48 = scmp.eq.s32.totalorder %s20, 0
      %p49 = por %p47, %p48
      %s50 = smul.u32 %s14, 2
      %s51 = sadd.s32 %s50, 1
      %s52 = smul.u32 %s21, 2
      %s53 = sadd.s32 %s52, 1
      %s54 = ssub.s32 %s51, %s53
      %p55 = scmp.eq.s32.totalorder %s54, 0
      %s57 = sadd.s32 %s56, 1
      %s58 = scalar_select %p55, %s56, %s57
      %p61 = pneg %p55
      %p62 = scmp.eq.s32.totalorder %s14, 31
      %p63 = por %p61, %p62
      %p64 = scmp.ne.s32.totalorder %s56, %s59
      %p65 = scmp.eq.s32.totalorder %s14, 0
      %p66 = por %p64, %p65
      %p67 = scmp.ne.s32.totalorder %s56, %s59
      %p68 = scmp.eq.s32.totalorder %s19, 31
      %p69 = por %p67, %p68
      %p70 = scmp.ne.s32.totalorder %s59, %s60
      %p71 = scmp.eq.s32.totalorder %s19, 0
      %p72 = por %p70, %p71
      %p73 = scmp.ne.s32.totalorder %s59, %s60
      %p74 = scmp.eq.s32.totalorder %s20, 31
      %p75 = por %p73, %p74
      %p77 = scmp.ne.s32.totalorder %s60, %s76
      %p78 = scmp.eq.s32.totalorder %s20, 0
      %p79 = por %p77, %p78
      %s81 = sadd.s32 %s80, 1
      %p84 = scmp.eq.s32.totalorder %s14, 31
      %p85 = scmp.ne.s32.totalorder %s80, %s82
      %p86 = scmp.eq.s32.totalorder %s14, 0
      %p87 = por %p85, %p86
      %p88 = scmp.ne.s32.totalorder %s80, %s82
      %p89 = scmp.eq.s32.totalorder %s19, 31
      %p90 = por %p88, %p89
      %p91 = scmp.ne.s32.totalorder %s82, %s83
      %p92 = scmp.eq.s32.totalorder %s19, 0
      %p93 = por %p91, %p92
      %p94 = scmp.ne.s32.totalorder %s82, %s83
      %p95 = scmp.eq.s32.totalorder %s20, 31
      %p96 = por %p94, %p95
      %p98 = scmp.ne.s32.totalorder %s83, %s97
      %p99 = scmp.eq.s32.totalorder %s20, 0
      %p100 = por %p98, %p99
      %s102 = sadd.s32 %s101, 1
      %p105 = scmp.eq.s32.totalorder %s14, 31
      %p106 = scmp.ne.s32.totalorder %s101, %s103
      %p107 = scmp.eq.s32.totalorder %s14, 0
      %p108 = por %p106, %p107
      %p109 = scmp.ne.s32.totalorder %s101, %s103
      %p110 = scmp.eq.s32.totalorder %s19, 31
      %p111 = por %p109, %p110
      %p112 = scmp.ne.s32.totalorder %s103, %s104
      %p113 = scmp.eq.s32.totalorder %s19, 0
      %p114 = por %p112, %p113
      %p115 = scmp.ne.s32.totalorder %s103, %s104
      %p116 = scmp.eq.s32.totalorder %s20, 31
      %p117 = por %p115, %p116
      %p119 = scmp.ne.s32.totalorder %s104, %s118
      %p120 = scmp.eq.s32.totalorder %s20, 0
      %p121 = por %p119, %p120
      %s123 = sadd.s32 %s122, 1
      %p126 = scmp.eq.s32.totalorder %s14, 31
      %p127 = scmp.ne.s32.totalorder %s122, %s124
      %p128 = scmp.eq.s32.totalorder %s14, 0
      %p129 = por %p127, %p128
      %p130 = scmp.ne.s32.totalorder %s122, %s124
      %p131 = scmp.eq.s32.totalorder %s19, 31
      %p132 = por %p130, %p131
      %p133 = scmp.ne.s32.totalorder %s124, %s125
      %p134 = scmp.eq.s32.totalorder %s19, 0
      %p135 = por %p133, %p134
      %p136 = scmp.ne.s32.totalorder %s124, %s125
      %p137 = scmp.eq.s32.totalorder %s20, 31
      %p138 = por %p136, %p137
      %p140 = scmp.ne.s32.totalorder %s125, %s139
      %p141 = scmp.eq.s32.totalorder %s20, 0
      %p142 = por %p140, %p141
      %s143 = ssub.s32 %s14, %s21
      %p144 = scmp.eq.s32.totalorder %s143, 0
      %s146 = sadd.s32 %s145, 1
      %s147 = scalar_select %p144, %s145, %s146
      %p150 = pneg %p144
      %p151 = scmp.eq.s32.totalorder %s14, 31
      %p152 = por %p150, %p151
      %p153 = scmp.ne.s32.totalorder %s145, %s148
      %p154 = scmp.eq.s32.totalorder %s14, 0
      %p155 = por %p153, %p154
      %p156 = scmp.ne.s32.totalorder %s145, %s148
      %p157 = scmp.eq.s32.totalorder %s19, 31
      %p158 = por %p156, %p157
      %p159 = scmp.ne.s32.totalorder %s148, %s149
      %p160 = scmp.eq.s32.totalorder %s19, 0
      %p161 = por %p159, %p160
      %p162 = scmp.ne.s32.totalorder %s148, %s149
      %p163 = scmp.eq.s32.totalorder %s20, 31
      %p164 = por %p162, %p163
      %p166 = scmp.ne.s32.totalorder %s149, %s165
      %p167 = scmp.eq.s32.totalorder %s20, 0
      %p168 = por %p166, %p167
      %p169 = scmp.le.s32.totalorder 1, %s14
      %p170 = scmp.lt.s32.totalorder %s14, 33
      %p171 = pnand %p169, %p170
      %p172 = pneg %p171
      // Predicated region
      $region9: #{tpu_custom_call.1} parent=5 // pred_check
        _
      $region10: #{tpu_custom_call.1} parent=5 // pred_check_branch
        %174 = sbr.rel (%p171) target = $region12
      $region11: #{tpu_custom_call.1} parent=5 // pred_region
        %s175 = ssub.s32 %s14, 1
        // Predicated region
        $region13: #{tpu_custom_call.1} parent=11 // pred_check
          %p176 = pneg %p93
        $region14: #{tpu_custom_call.1} parent=11 // pred_check_branch
          %178 = sbr.rel (%p176) target = $region16
        $region15: #{tpu_custom_call.1} parent=11 // pred_region
          _
        $region16: #{tpu_custom_call.1} parent=11 // pred_fallthru
          _
        // Predicated region
        $region17: #{tpu_custom_call.1} parent=11 // pred_check
          %p179 = pneg %p114
        $region18: #{tpu_custom_call.1} parent=11 // pred_check_branch
          %181 = sbr.rel (%p179) target = $region20
        $region19: #{tpu_custom_call.1} parent=11 // pred_region
          _
        $region20: #{tpu_custom_call.1} parent=11 // pred_fallthru
          _
        // Predicated region
        $region21: #{tpu_custom_call.1} parent=11 // pred_check
          %p182 = pneg %p135
        $region22: #{tpu_custom_call.1} parent=11 // pred_check_branch
          %184 = sbr.rel (%p182) target = $region24
        $region23: #{tpu_custom_call.1} parent=11 // pred_region
          _
        $region24: #{tpu_custom_call.1} parent=11 // pred_fallthru
          _
      $region12: #{tpu_custom_call.1} parent=5 // pred_fallthru
        _
      %p185 = scmp.lt.s32.totalorder %s14, 32
      // Predicated region
      $region25: #{tpu_custom_call.1} parent=5 // pred_check
        %p186 = pneg %p185
      $region26: #{tpu_custom_call.1} parent=5 // pred_check_branch
        %188 = sbr.rel (%p186) target = $region28
      $region27: #{tpu_custom_call.1} parent=5 // pred_region
        // Predicated region
        $region29: #{tpu_custom_call.1} parent=27 // pred_check
          %p189 = pneg %p36
        $region30: #{tpu_custom_call.1} parent=27 // pred_check_branch
          %191 = sbr.rel (%p189) target = $region32
        $region31: #{tpu_custom_call.1} parent=27 // pred_region
          %s192 = smul.u32 %s14, 2
          %p193 = scmp.lt.s32.totalorder %s192, 63
          %s194 = scalar_select %p193, %s192, 63
          %s195 = smul.addr %s194, 4
          %s196 = smul.addr %s195, 4
          %s197 = scalar_lea.vmem %s0, %s196
          %s198 = smul.u32 %s14, 2
        $region32: #{tpu_custom_call.1} parent=27 // pred_fallthru
          _
        // Predicated region
        $region33: #{tpu_custom_call.1} parent=27 // pred_check
          %p199 = pneg %p66
        $region34: #{tpu_custom_call.1} parent=27 // pred_check_branch
          %201 = sbr.rel (%p199) target = $region36
        $region35: #{tpu_custom_call.1} parent=27 // pred_region
          %s202 = smul.u32 %s14, 2
          %s203 = sadd.s32 %s202, 1
          %p204 = scmp.lt.s32.totalorder %s203, 63
          %s205 = scalar_select %p204, %s203, 63
          %s206 = smul.addr %s205, 4
          %s207 = smul.addr %s206, 4
          %s208 = scalar_lea.vmem %s1, %s207
          %s209 = smul.u32 %s14, 2
          %s210 = sadd.s32 %s209, 1
        $region36: #{tpu_custom_call.1} parent=27 // pred_fallthru
          _
      $region28: #{tpu_custom_call.1} parent=5 // pred_fallthru
        _
      %p211 = scmp.le.s32.totalorder 1, %s14
      %p212 = scmp.lt.s32.totalorder %s14, 33
      %p213 = pnand %p211, %p212
      %p214 = pneg %p213
      // Predicated region
      $region37: #{tpu_custom_call.1} parent=5 // pred_check
        _
      $region38: #{tpu_custom_call.1} parent=5 // pred_check_branch
        %216 = sbr.rel (%p213) target = $region40
      $region39: #{tpu_custom_call.1} parent=5 // pred_region
        %s217 = ssub.s32 %s14, 1
        %s218 = smul.u32 %s19, 2
        %p219 = scmp.lt.s32.totalorder %s218, 63
        %s220 = scalar_select %p219, %s218, 63
        %s221 = smul.addr %s220, 4
        %s222 = smul.addr %s221, 4
        %s223 = scalar_lea.vmem %s0, %s222
        %p224 = pneg %p42
        %p225 = pneg %p39
        %s226 = smul.u32 %s19, 2
        %s227 = sadd.s32 %s226, 1
        %p228 = scmp.lt.s32.totalorder %s227, 63
        %s229 = scalar_select %p228, %s227, 63
        %s230 = smul.addr %s229, 4
        %s231 = smul.addr %s230, 4
        %s232 = scalar_lea.vmem %s1, %s231
        %p233 = pneg %p72
        %p234 = pneg %p69
        %p235 = pneg %p93
        %p236 = pneg %p90
        %p237 = pneg %p114
        %p238 = pneg %p111
        %p239 = pneg %p135
        %p240 = pneg %p132
        %p241 = pneg %p161
        %p242 = pneg %p158
        %s243 = sand.u32 %s148, 1
        %s244 = scalar_lea.sflag [#allocation3], %s243
        %s245 = sand.u32 %s148, 1
        %s246 = smul.addr %s245, 8
        %s247 = scalar_lea.vmem [#allocation2], %s246
        %s248 = smul.u32 %s19, 2
        %p249 = scmp.lt.s32.totalorder %s248, 63
        %s250 = scalar_select %p249, %s248, 63
        %s251 = smul.addr %s250, 4
        %s252 = smul.addr %s251, 4
        %s253 = scalar_lea.vmem %s0, %s252
        %s254 = smul.u32 %s19, 2
        %s255 = smul.u32 %s19, 2
        %s256 = sadd.s32 %s255, 1
        %p257 = scmp.lt.s32.totalorder %s256, 63
        %s258 = scalar_select %p257, %s256, 63
        %s259 = smul.addr %s258, 4
        %s260 = smul.addr %s259, 4
        %s261 = scalar_lea.vmem %s1, %s260
        %s262 = smul.u32 %s19, 2
        %s263 = sadd.s32 %s262, 1
        %v265 = vld [vmem:[%s253] sm:$0xf]
        %v266 = vld [vmem:[%s253 + $0x4] sm:$0xf]
        %v267 = vld [vmem:[%s253 + $0x8] sm:$0xf]
        %v268 = vld [vmem:[%s253 + $0xc] sm:$0xf]
        %v269 = vld [vmem:[%s261] sm:$0xf]
        %v270 = vld [vmem:[%s261 + $0x4] sm:$0xf]
        %v271 = vld [vmem:[%s261 + $0x8] sm:$0xf]
        %v272 = vld [vmem:[%s261 + $0xc] sm:$0xf]
        %v273 = vadd.bf16 %v265, %v269
        %v274 = vadd.bf16 %v266, %v270
        %v275 = vadd.bf16 %v267, %v271
        %v276 = vadd.bf16 %v268, %v272
        %v277 = vld [vmem:[%s2] sm:$0xf]
        %v278 = vld [vmem:[%s2 + $0x4] sm:$0xf]
        %v281 = vunpack.c.l.b16 %v277
        %v282 = vunpack.c.l.b16 %v278
        %v283 = vpack.c.b16 %v282, %v281
        %v288 = vunpack.c.l.b16 %v273
        %v289 = vunpack.c.l.b16 %v274
        %v290 = vunpack.c.l.b16 %v275
        %v291 = vunpack.c.l.b16 %v276
        %v292 = vpack.c.b16 %v289, %v288
        %v293 = vpack.c.b16 %v291, %v290
        %vm296 = vcmask 261120
        %v298 = vsel %vm296, %v283, 0
        %300 = vmatprep.subr.bf16.mxu0 0
        %301 = vmatpush1.bf16.msra.mxu0 0
        %302 = vmatprep.subr.bf16.mxu0 0
        %303 = vmatpush1.bf16.msra.mxu0 0
        %304 = vmatprep.subr.bf16.mxu0 0
        %305 = vmatpush1.bf16.msra.mxu0 0
        %306 = vmatprep.subr.bf16.mxu0 0
        %307 = vmatpush1.bf16.msra.mxu0 0
        %308 = vmatprep.subr.bf16.mxu0 0
        %309 = vmatpush1.bf16.msra.mxu0 0
        %310 = vmatprep.subr.bf16.mxu0 0
        %311 = vmatpush1.bf16.msra.mxu0 0
        %312 = vmatprep.subr.bf16.mxu0 0
        %313 = vmatpush1.bf16.msra.mxu0 %v293
        %314 = vmatprep.subr.bf16.mxu0 0
        %315 = vmatpush1.bf16.msra.mxu0 %v292
        %316 = vmatprep.subr.bf16.mxu0 0
        %317 = vmatpush2.bf16.msra.mxu0 0
        %318 = vmatprep.subr.bf16.mxu0 0
        %319 = vmatpush2.bf16.msra.mxu0 0
        %320 = vmatprep.subr.bf16.mxu0 0
        %321 = vmatpush2.bf16.msra.mxu0 0
        %322 = vmatprep.subr.bf16.mxu0 0
        %323 = vmatpush2.bf16.msra.mxu0 0
        %324 = vmatprep.subr.bf16.mxu0 0
        %325 = vmatpush2.bf16.msra.mxu0 0
        %326 = vmatprep.subr.bf16.mxu0 0
        %327 = vmatpush2.bf16.msra.mxu0 0
        %328 = vmatprep.subr.bf16.mxu0 0
        %329 = vmatpush2.bf16.msra.mxu0 0
        %330 = vmatprep.subr.bf16.mxu0 0
        %331 = vmatpush2.bf16.msra.mxu0 0
        %332 = vmatprep.mubr.bf16.mxu0 0
        %333 = vmatmul.mubr.bf16.gmra.mxu0 %v298
        %v334 = vpop.f32.mrf.mxu0
        %v335 = vadd.f32 0.0, %v334
        %v336 = vpop.f32.mrf.mxu0
        %v337 = vpop.f32.mrf.mxu0
        %v338 = vadd.f32 0.0, %v337
        %v339 = vpop.f32.mrf.mxu0
        %340 = vdwg.mxu0
        %v341 = vpack.c.bf16 %v338, %v335
        %v342 = vld [vmem:[%s3] sm:$0xf]
        %v343 = vld [vmem:[%s4] sm:$0x1]
        %v345 = vlaneseq
        %v346 = vshrl.u32 %v345, 7
        %v347 = vsub.s32 0, %v346
        %v348 = vrot.slane %v343, %v347
        %vm350 = vcmask 64512
        %v352 = vsel %vm350, %v341, 0
        %vm354 = vcmask 1043456
        %v356 = vsel %vm354, %v342, 0
        %358 = vmatprep.subr.bf16.mxu0 0
        %359 = vmatpush1.bf16.msra.mxu0 0
        %360 = vmatprep.subr.bf16.mxu0 0
        %361 = vmatpush1.bf16.msra.mxu0 0
        %362 = vmatprep.subr.bf16.mxu0 0
        %363 = vmatpush1.bf16.msra.mxu0 0
        %364 = vmatprep.subr.bf16.mxu0 0
        %365 = vmatpush1.bf16.msra.mxu0 0
        %366 = vmatprep.subr.bf16.mxu0 0
        %367 = vmatpush1.bf16.msra.mxu0 0
        %368 = vmatprep.subr.bf16.mxu0 0
        %369 = vmatpush1.bf16.msra.mxu0 0
        %370 = vmatprep.subr.bf16.mxu0 0
        %371 = vmatpush1.bf16.msra.mxu0 0
        %372 = vmatprep.subr.bf16.mxu0 0
        %373 = vmatpush1.bf16.msra.mxu0 %v356
        %374 = vmatprep.subr.bf16.mxu0 0
        %375 = vmatpush2.bf16.msra.mxu0 0
        %376 = vmatprep.subr.bf16.mxu0 0
        %377 = vmatpush2.bf16.msra.mxu0 0
        %378 = vmatprep.subr.bf16.mxu0 0
        %379 = vmatpush2.bf16.msra.mxu0 0
        %380 = vmatprep.subr.bf16.mxu0 0
        %381 = vmatpush2.bf16.msra.mxu0 0
        %382 = vmatprep.subr.bf16.mxu0 0
        %383 = vmatpush2.bf16.msra.mxu0 0
        %384 = vmatprep.subr.bf16.mxu0 0
        %385 = vmatpush2.bf16.msra.mxu0 0
        %386 = vmatprep.subr.bf16.mxu0 0
        %387 = vmatpush2.bf16.msra.mxu0 0
        %388 = vmatprep.subr.bf16.mxu0 0
        %389 = vmatpush2.bf16.msra.mxu0 0
        %390 = vmatprep.mubr.bf16.mxu0 0
        %391 = vmatmul.mubr.bf16.gmra.mxu0 %v352
        %v392 = vpop.f32.mrf.mxu0
        %v393 = vadd.f32 %v348, %v392
        %v394 = vpop.f32.mrf.mxu0
        %v395 = vpop.f32.mrf.mxu0
        %v396 = vadd.f32 %v348, %v395
        %v397 = vpop.f32.mrf.mxu0
        %398 = vdwg.mxu0
        %v399 = vmax.f32 %v393, 0.0
        %v400 = vmax.f32 %v396, 0.0
        %v401 = vpack.c.bf16 %v400, %v399
        %v403 = vunpack.c.l.b16 %v401
        %v404 = vunpack.c.h.b16 %v401
        %v405 = vpack.c.b16 %v403, %v403
        %v406 = vpack.c.b16 %v404, %v404
        %vm409 = vcmask 519168
        %410 = vst.msk [vmem:[%s247] sm:$0xf] %vm409, %v405
        %411 = vst.msk [vmem:[%s247 + $0x4] sm:$0xf] %vm409, %v406
        %s412 = sand.u32 %s148, 1
        %s413 = scalar_lea.sflag [#allocation3], %s412
        %s414 = sand.u32 %s148, 1
        %s415 = smul.addr %s414, 8
        %s416 = scalar_lea.vmem [#allocation2], %s415
        // Predicated region
        $region41: #{tpu_custom_call.1} parent=39 // pred_check
          %p417 = pneg %p158
        $region42: #{tpu_custom_call.1} parent=39 // pred_check_branch
          %419 = sbr.rel (%p417) target = $region44
        $region43: #{tpu_custom_call.1} parent=39 // pred_region
          %s421 = ssub.s32 128, 128
          %422 = vsyncadd %s413, %s421
          %s423 = smul.addr %s19, 2
          %s424 = smul.addr %s423, 64
          %s425 = scalar_lea.hbm %s5, %s424
          %s426 = sshll.u32 %s416, 4
          %s427 = int_to_ptr.vmem [resolvable:$true] %s426
          %432 = dma.vmem_to_hbm [thread:$0]  %s427, 128, %s425, %s413, 64, 64, 4
        $region44: #{tpu_custom_call.1} parent=39 // pred_fallthru
          _
      $region40: #{tpu_custom_call.1} parent=5 // pred_fallthru
        _
      %p433 = scmp.le.s32.totalorder 2, %s14
      // Predicated region
      $region45: #{tpu_custom_call.1} parent=5 // pred_check
        %p434 = pneg %p433
      $region46: #{tpu_custom_call.1} parent=5 // pred_check_branch
        %436 = sbr.rel (%p434) target = $region48
      $region47: #{tpu_custom_call.1} parent=5 // pred_region
        %s437 = ssub.s32 %s14, 2
        // Predicated region
        $region49: #{tpu_custom_call.1} parent=47 // pred_check
          %p438 = pneg %p164
        $region50: #{tpu_custom_call.1} parent=47 // pred_check_branch
          %440 = sbr.rel (%p438) target = $region52
        $region51: #{tpu_custom_call.1} parent=47 // pred_region
          %s441 = sand.u32 %s149, 1
          %s442 = scalar_lea.sflag [#allocation3], %s441
          %s443 = sand.u32 %s149, 1
          %s444 = smul.addr %s443, 8
          %s445 = scalar_lea.vmem [#allocation2], %s444
          %446 = dma.done %s442, 128
        $region52: #{tpu_custom_call.1} parent=47 // pred_fallthru
          _
      $region48: #{tpu_custom_call.1} parent=5 // pred_fallthru
        _
    $region6: #{tpu_custom_call.1} parent=1 // loop_footer
      %s18 = sadd.s32 1, %s14
    $region7: #{tpu_custom_call.1} parent=1 // loop_footer_branch
      %13 = sbr.rel target = $region3
    $region8: #{tpu_custom_call.1} parent=1 // loop_exit
      _
    %447 = vsyncpa [#allocation3], 1
    %s448 = scalar_lea.sflag [#allocation3], 1
    %449 = vsyncpa %s448, 1

</llo_original>
